<compile_context>
chip_gen: v6e
topology: v6e:2x2x1
jax: 0.10.0
libtpu: 0.0.40
codegen_flags: <defaults>
</compile_context>

<pallas_src>
import functools

import jax
import jax.numpy as jnp
import numpy as np
from jax.experimental import pallas as pl
from jax.experimental.pallas import tpu as pltpu

MASKING = -1000000000.0
_LANE = 128
# Rows per grid step.  Multiple of 8 (sublane).  VMEM per step:
# 2 bufs x (2048*128*4B in + 2048*128*4B out-tile) ~= 4 MiB -> far under the
# 32 MiB scoped-VMEM default on v7x and trivial on v5e/v6e.
_MAX_TILE_B = 2048
# Below this batch size the fixed pallas_call dispatch cost dominates; use the
# fused pure-jnp path instead.
_PALLAS_MIN_B = 64


def _round_up(n, m):
    return ((n + m - 1) // m) * m


# --------------------------------------------------------------------------
# Pallas kernel
# --------------------------------------------------------------------------
def _mask_kernel(x_ref, o_ref, *, col_offs, elif_mode):
    """x_ref: (TILE_B, LB) native dtype -- only the lane block that holds the
    flag columns.  o_ref: (TILE_B, output_size) float32 (full output width)."""
    x = x_ref[...]
    one = jnp.ones((), x.dtype)
    o3, o7, o8, o12 = col_offs
    f3 = x[:, o3:o3 + 1] == one          # x[:, -3]  -> masks action 4
    f7 = x[:, o7:o7 + 1] == one          # x[:, -7]  -> masks action 3
    f8 = x[:, o8:o8 + 1] == one          # x[:, -8]  -> masks action 1
    f12 = x[:, o12:o12 + 1] == one       # x[:, -12] -> masks action 2
    if elif_mode:
        # 1-D torch path uses elif: -7 only checked when -3 != 1, and
        # -12 only checked when -8 != 1.
        f7 = f7 & jnp.logical_not(f3)
        f12 = f12 & jnp.logical_not(f8)

    cols = jax.lax.broadcasted_iota(jnp.int32, o_ref.shape, 1)
    hit = (((cols == 4) & f3) | ((cols == 3) & f7) |
           ((cols == 1) & f8) | ((cols == 2) & f12))
    o_ref[...] = jnp.where(hit, MASKING, 1.0).astype(o_ref.dtype)


def _mask_rows_pallas(x2d, output_size, elif_mode):
    """(B, F) -> (B, output_size) float32 mask via Pallas."""
    b, f = x2d.shape
    rem = f % _LANE

    # --- Input window: DMA only the lane block containing cols -3/-7/-8/-12.
    if f <= _LANE:
        lane_block, blk_col, base = f, 0, 0
    elif rem != 0 and rem < 12:
        # Flag columns straddle the last lane-block boundary.  Take one narrow
        # static slice of the last 128 columns (inside the jit) so the kernel
        # keeps its minimal ~512 B/row input window instead of reading all F.
        x2d = x2d[:, f - _LANE:]
        f = _LANE
        lane_block, blk_col, base = _LANE, 0, 0
    else:
        n_blocks = pl.cdiv(f, _LANE)
        lane_block, blk_col, base = _LANE, n_blocks - 1, (n_blocks - 1) * _LANE
    col_offs = tuple(f - k - base for k in (3, 7, 8, 12))

    # --- Batch tiling: as large as possible (amortize the ~0.35us/step grid
    # overhead), but keep >= 2 grid steps so v7x's two TensorCores can both
    # work (costs one extra tiny step on 1-TC v5e/v6e).
    tile_b = min(_MAX_TILE_B, _round_up(pl.cdiv(b, 2), 8), _round_up(b, 8))
    grid = (pl.cdiv(b, tile_b),)

    kern = functools.partial(_mask_kernel, col_offs=col_offs,
                             elif_mode=elif_mode)
    return pl.pallas_call(
        kern,
        out_shape=jax.ShapeDtypeStruct((b, output_size), jnp.float32),
        grid=grid,
        in_specs=[pl.BlockSpec((tile_b, lane_block), lambda i: (i, blk_col))],
        # Last dim == full array dim -> legal narrow block; writes the exact
        # (B, output_size) result, no padded slab / no wrapper slice pass.
        out_specs=pl.BlockSpec((tile_b, output_size), lambda i: (i, 0)),
        compiler_params=pltpu.CompilerParams(
            dimension_semantics=("parallel",)),
    )(x2d)


# --------------------------------------------------------------------------
# Pure-jnp path (tiny batches / 1-D input): fuses to one trivial XLA op.
# --------------------------------------------------------------------------
def _mask_rows_jnp(x2d, output_size, elif_mode):
    one = jnp.ones((), x2d.dtype)
    f3 = x2d[:, -3:-2] == one
    f7 = x2d[:, -7:-6] == one
    f8 = x2d[:, -8:-7] == one
    f12 = x2d[:, -12:-11] == one
    if elif_mode:
        f7 = f7 & jnp.logical_not(f3)
        f12 = f12 & jnp.logical_not(f8)
    cols = jnp.arange(output_size)[None, :]
    hit = (((cols == 4) & f3) | ((cols == 3) & f7) |
           ((cols == 1) & f8) | ((cols == 2) & f12))
    return jnp.where(hit, MASKING, 1.0).astype(jnp.float32)


def _mask_rows(x2d, output_size, elif_mode):
    b, f = x2d.shape
    if f < 12:
        raise ValueError("BooleanMaskLayer needs at least 12 feature columns")
    if output_size < 5:
        raise ValueError("output_size must be >= 5 (indices 1..4 are written)")
    if b < _PALLAS_MIN_B:
        return _mask_rows_jnp(x2d, output_size, elif_mode)
    return _mask_rows_pallas(x2d, output_size, elif_mode)


# --------------------------------------------------------------------------
# Jitted entry points (reshape folded inside the jit -> single program).
# --------------------------------------------------------------------------
@functools.partial(jax.jit, static_argnames=("output_size",))
def _forward_2d(x2d, output_size):
    return _mask_rows(x2d, output_size, elif_mode=False)[:, None, :]


@functools.partial(jax.jit, static_argnames=("output_size",))
def _forward_1d(x1d, output_size):
    return _mask_rows(x1d[None, :], output_size, elif_mode=True)[0]


def _normalize_dtype(x):
    # TPU vector path has no f64/i64; 0/1 flags are exact in f32/i32.
    if x.dtype == jnp.float64:
        return x.astype(jnp.float32)
    if x.dtype == jnp.int64:
        return x.astype(jnp.int32)
    return x


def boolean_mask_layer(x, output_size):
    """Replicates BooleanMaskLayer.forward semantics (output dtype float32)."""
    x = _normalize_dtype(jnp.squeeze(jnp.asarray(x)))
    if x.ndim == 1:
        return _forward_1d(x, output_size)            # (output_size,)
    elif x.ndim == 2:
        return _forward_2d(x, output_size)             # (B, 1, output_size)
    else:
        raise ValueError("BooleanMaskLayer expects squeezed ndim of 1 or 2")


# --------------------------------------------------------------------------
# NumPy reference (mirrors the torch module exactly).
# --------------------------------------------------------------------------
def _numpy_reference(x, output_size):
    x = np.asarray(x, np.float64).squeeze()
    if x.ndim == 1:
        mask = np.ones(output_size)
        if x[-3] == 1.0:
            mask[4] = MASKING
        elif x[-7] == 1.0:
            mask[3] = MASKING
        if x[-8] == 1.0:
            mask[1] = MASKING
        elif x[-12] == 1.0:
            mask[2] = MASKING
        return mask
    mask = np.ones((x.shape[0], output_size))
    mask[np.where(x[:, -3] == 1.0), 4] = MASKING
    mask[np.where(x[:, -7] == 1.0), 3] = MASKING
    mask[np.where(x[:, -8] == 1.0), 1] = MASKING
    mask[np.where(x[:, -12] == 1.0), 2] = MASKING
    return mask[:, None, :]


if __name__ == "__main__":
    output_size = 8
    F = 16

    key = jax.random.PRNGKey(0)
    k1, k2, k3 = jax.random.split(key, 3)
    # 0/1 feature matrices so the ==1.0 conditions actually fire.
    x_batched = (jax.random.uniform(k1, (128, F)) > 0.5).astype(jnp.float32)  # Pallas path
    x_tiny = (jax.random.uniform(k2, (8, F)) > 0.5).astype(jnp.float32)       # fused jnp path
    x_single = (jax.random.uniform(k3, (1, F)) > 0.5).astype(jnp.float32)     # squeezes to 1-D

    out_b = jax.block_until_ready(boolean_mask_layer(x_batched, output_size))
    out_t = jax.block_until_ready(boolean_mask_layer(x_tiny, output_size))
    out_s = jax.block_until_ready(boolean_mask_layer(x_single, output_size))

    ref_b = _numpy_reference(np.asarray(x_batched), output_size)
    ref_t = _numpy_reference(np.asarray(x_tiny), output_size)
    ref_s = _numpy_reference(np.asarray(x_single), output_size)

    assert out_b.shape == (128, 1, output_size)
    assert out_t.shape == (8, 1, output_size)
    assert out_s.shape == (output_size,)
    np.testing.assert_allclose(np.asarray(out_b), ref_b, rtol=0, atol=0)
    np.testing.assert_allclose(np.asarray(out_t), ref_t, rtol=0, atol=0)
    np.testing.assert_allclose(np.asarray(out_s), ref_s, rtol=0, atol=0)

    print("KERNEL_OK")
</pallas_src>

<mosaic_0001>
module attributes {stable_mosaic.version = 11 : i64} {
  func.func @_mask_kernel(%arg0: i32, %arg1: memref<64x16xf32, #tpu.memory_space<vmem>>, %arg2: memref<64x8xf32, #tpu.memory_space<vmem>>) attributes {dimension_semantics = [#tpu.dimension_semantics<parallel>], iteration_bounds = array<i64: 2>, scalar_prefetch = 0 : i64, scratch_operands = 0 : i64, tpu.core_type = #tpu.core_type<tc>, window_params = [{transform_indices = @transform_0, window_bounds = array<i64: 64, 16>}, {transform_indices = @transform_1, window_bounds = array<i64: 64, 8>}]} {
    %c0 = arith.constant 0 : index
    %c0_0 = arith.constant 0 : index
    %0 = vector.load %arg1[%c0, %c0_0] : memref<64x16xf32, #tpu.memory_space<vmem>>, vector<64x16xf32>
    %1 = vector.extract_strided_slice %0 {offsets = [0, 13], sizes = [64, 1], strides = [1, 1]} : vector<64x16xf32> to vector<64x1xf32>
    %cst = arith.constant 1.000000e+00 : f32
    %2 = vector.broadcast %cst : f32 to vector<64x1xf32>
    %3 = arith.cmpf oeq, %1, %2 : vector<64x1xf32>
    %4 = vector.extract_strided_slice %0 {offsets = [0, 9], sizes = [64, 1], strides = [1, 1]} : vector<64x16xf32> to vector<64x1xf32>
    %cst_1 = arith.constant 1.000000e+00 : f32
    %5 = vector.broadcast %cst_1 : f32 to vector<64x1xf32>
    %6 = arith.cmpf oeq, %4, %5 : vector<64x1xf32>
    %7 = vector.extract_strided_slice %0 {offsets = [0, 8], sizes = [64, 1], strides = [1, 1]} : vector<64x16xf32> to vector<64x1xf32>
    %cst_2 = arith.constant 1.000000e+00 : f32
    %8 = vector.broadcast %cst_2 : f32 to vector<64x1xf32>
    %9 = arith.cmpf oeq, %7, %8 : vector<64x1xf32>
    %10 = vector.extract_strided_slice %0 {offsets = [0, 4], sizes = [64, 1], strides = [1, 1]} : vector<64x16xf32> to vector<64x1xf32>
    %cst_3 = arith.constant 1.000000e+00 : f32
    %11 = vector.broadcast %cst_3 : f32 to vector<64x1xf32>
    %12 = arith.cmpf oeq, %10, %11 : vector<64x1xf32>
    %13 = tpu.iota {dimensions = array<i32: 1>} : vector<64x8xi32>
    %c4_i32 = arith.constant 4 : i32
    %14 = vector.broadcast %c4_i32 : i32 to vector<64x8xi32>
    %15 = arith.cmpi eq, %13, %14 : vector<64x8xi32>
    %16 = vector.broadcast %3 : vector<64x1xi1> to vector<64x8xi1>
    %17 = arith.andi %15, %16 : vector<64x8xi1>
    %c3_i32 = arith.constant 3 : i32
    %18 = vector.broadcast %c3_i32 : i32 to vector<64x8xi32>
    %19 = arith.cmpi eq, %13, %18 : vector<64x8xi32>
    %20 = vector.broadcast %6 : vector<64x1xi1> to vector<64x8xi1>
    %21 = arith.andi %19, %20 : vector<64x8xi1>
    %22 = arith.ori %17, %21 : vector<64x8xi1>
    %c1_i32 = arith.constant 1 : i32
    %23 = vector.broadcast %c1_i32 : i32 to vector<64x8xi32>
    %24 = arith.cmpi eq, %13, %23 : vector<64x8xi32>
    %25 = vector.broadcast %9 : vector<64x1xi1> to vector<64x8xi1>
    %26 = arith.andi %24, %25 : vector<64x8xi1>
    %27 = arith.ori %22, %26 : vector<64x8xi1>
    %c2_i32 = arith.constant 2 : i32
    %28 = vector.broadcast %c2_i32 : i32 to vector<64x8xi32>
    %29 = arith.cmpi eq, %13, %28 : vector<64x8xi32>
    %30 = vector.broadcast %12 : vector<64x1xi1> to vector<64x8xi1>
    %31 = arith.andi %29, %30 : vector<64x8xi1>
    %32 = arith.ori %27, %31 : vector<64x8xi1>
    %cst_4 = arith.constant -1.000000e+09 : f32
    %cst_5 = arith.constant 1.000000e+00 : f32
    %33 = vector.broadcast %cst_4 : f32 to vector<64x8xf32>
    %34 = vector.broadcast %cst_5 : f32 to vector<64x8xf32>
    %35 = arith.select %32, %33, %34 : vector<64x8xi1>, vector<64x8xf32>
    %c0_6 = arith.constant 0 : index
    %c0_7 = arith.constant 0 : index
    %36 = vector.load %arg2[%c0_6, %c0_7] : memref<64x8xf32, #tpu.memory_space<vmem>>, vector<64x8xf32>
    tpu.vector_store %arg2[%c0_6, %c0_7], %35 {strides = array<i32>} : memref<64x8xf32, #tpu.memory_space<vmem>>, vector<64x8xf32>,
    return
  }
  func.func @transform_0(%arg0: i32) -> (i32, i32) {
    %c0_i32 = arith.constant 0 : i32
    %c0_i32_0 = arith.constant 0 : i32
    return %arg0, %c0_i32 : i32, i32
  }
  func.func @transform_1(%arg0: i32) -> (i32, i32) {
    %c0_i32 = arith.constant 0 : i32
    %c0_i32_0 = arith.constant 0 : i32
    return %arg0, %c0_i32 : i32, i32
  }
}

</mosaic_0001>

<llo_original>
// kernel: _forward_2d.1
$region0: #{_forward_2d.1}
  #allocation0 [shape = 'u32[]', space=smem, size = 0x4, offset = 0x4, fixed_abs, tag = 'smem constant byte address 0x4 - core index']
  #allocation1 [shape = 'u32[144,128]{1,0:T(1,128)}', space=vmem, size = 0x12000, scoped, tag = 'internal scratch']
  %s0 = inlined_call_operand.vmem [shape: f32[128,16], index: 0, kind: input, shape index: {}]
  %s1 = inlined_call_operand.vmem [shape: f32[128,8], index: 1, kind: output, shape index: {}]
  %s2 = sld [smem:[#allocation0]]
  $region37: #{_forward_2d.1} parent=0
    _
  %s4 = ssub.s32 1, %s2
  %s5 = scalar_select 0, %s4, %s2
  loop: start=0, step=1, limit=4
  $region2: #{_forward_2d.1} parent=0 // loop_pre_header
    _
  $region3: #{_forward_2d.1} parent=0 // loop_header
    %s7 = sphi 0, %s11
    %p8 = scmp.ge.s32.totalorder %s7, 4
    %s17 = sphi 0, %s19
    %s20 = sphi 0, %s17
    %s21 = sphi 0, %s20
    %s37 = sphi 0, %s21
    %s43 = sphi 0, %s45
    %s46 = sphi 0, %s43
    %s47 = sphi 0, %s46
    %s63 = sphi 0, %s47
  $region4: #{_forward_2d.1} parent=0 // loop_header_branch
    %10 = sbr.rel (%p8) target = $region8
  $region5: #{_forward_2d.1} parent=0 // loop_body
    %s12 = ssub.s32 %s7, 1
    %s13 = ssub.s32 %s7, 2
    %s14 = sadd.s32 %s7, 1
    %s15 = ssub.s32 %s7, %s14
    %p16 = scmp.eq.s32.totalorder %s15, 0
    %s18 = sadd.s32 %s17, 1
    %s19 = scalar_select %p16, %s17, %s18
    %p22 = pneg %p16
    %p23 = scmp.eq.s32.totalorder %s7, 1
    %p24 = por %p22, %p23
    %p25 = scmp.ne.s32.totalorder %s17, %s20
    %p26 = scmp.eq.s32.totalorder %s7, 0
    %p27 = por %p25, %p26
    %p28 = scmp.ne.s32.totalorder %s17, %s20
    %p29 = scmp.eq.s32.totalorder %s12, 1
    %p30 = por %p28, %p29
    %p31 = scmp.ne.s32.totalorder %s20, %s21
    %p32 = scmp.eq.s32.totalorder %s12, 0
    %p33 = por %p31, %p32
    %p34 = scmp.ne.s32.totalorder %s20, %s21
    %p35 = scmp.eq.s32.totalorder %s13, 1
    %p36 = por %p34, %p35
    %p38 = scmp.ne.s32.totalorder %s21, %s37
    %p39 = scmp.eq.s32.totalorder %s13, 0
    %p40 = por %p38, %p39
    %s41 = ssub.s32 %s7, %s14
    %p42 = scmp.eq.s32.totalorder %s41, 0
    %s44 = sadd.s32 %s43, 1
    %s45 = scalar_select %p42, %s43, %s44
    %p48 = pneg %p42
    %p49 = scmp.eq.s32.totalorder %s7, 1
    %p50 = por %p48, %p49
    %p51 = scmp.ne.s32.totalorder %s43, %s46
    %p52 = scmp.eq.s32.totalorder %s7, 0
    %p53 = por %p51, %p52
    %p54 = scmp.ne.s32.totalorder %s43, %s46
    %p55 = scmp.eq.s32.totalorder %s12, 1
    %p56 = por %p54, %p55
    %p57 = scmp.ne.s32.totalorder %s46, %s47
    %p58 = scmp.eq.s32.totalorder %s12, 0
    %p59 = por %p57, %p58
    %p60 = scmp.ne.s32.totalorder %s46, %s47
    %p61 = scmp.eq.s32.totalorder %s13, 1
    %p62 = por %p60, %p61
    %p64 = scmp.ne.s32.totalorder %s47, %s63
    %p65 = scmp.eq.s32.totalorder %s13, 0
    %p66 = por %p64, %p65
    %p67 = scmp.le.s32.totalorder 1, %s7
    %p68 = scmp.lt.s32.totalorder %s7, 3
    %p69 = pnand %p67, %p68
    %p70 = pneg %p69
    // Predicated region
    $region9: #{_forward_2d.1} parent=5 // pred_check
      _
    $region10: #{_forward_2d.1} parent=5 // pred_check_branch
      %72 = sbr.rel (%p69) target = $region12
    $region11: #{_forward_2d.1} parent=5 // pred_region
      %s73 = ssub.s32 %s7, 1
    $region12: #{_forward_2d.1} parent=5 // pred_fallthru
      _
    %p74 = scmp.lt.s32.totalorder %s7, 2
    // Predicated region
    $region13: #{_forward_2d.1} parent=5 // pred_check
      %p75 = pneg %p74
    $region14: #{_forward_2d.1} parent=5 // pred_check_branch
      %77 = sbr.rel (%p75) target = $region16
    $region15: #{_forward_2d.1} parent=5 // pred_region
      // Predicated region
      $region17: #{_forward_2d.1} parent=15 // pred_check
        %p78 = pneg %p27
      $region18: #{_forward_2d.1} parent=15 // pred_check_branch
        %80 = sbr.rel (%p78) target = $region20
      $region19: #{_forward_2d.1} parent=15 // pred_region
        %s81 = smul.u32 8, %s7
        %p82 = scmp.lt.s32.totalorder %s81, 15
        %s83 = scalar_select %p82, %s81, 15
        %s84 = smul.addr %s83, 8
        %s85 = scalar_lea.vmem %s0, %s84
        %s86 = smul.u32 8, %s7
      $region20: #{_forward_2d.1} parent=15 // pred_fallthru
        _
    $region16: #{_forward_2d.1} parent=5 // pred_fallthru
      _
    %p87 = scmp.le.s32.totalorder 1, %s7
    %p88 = scmp.lt.s32.totalorder %s7, 3
    %p89 = pnand %p87, %p88
    %p90 = pneg %p89
    // Predicated region
    $region21: #{_forward_2d.1} parent=5 // pred_check
      _
    $region22: #{_forward_2d.1} parent=5 // pred_check_branch
      %92 = sbr.rel (%p89) target = $region24
    $region23: #{_forward_2d.1} parent=5 // pred_region
      %s93 = ssub.s32 %s7, 1
      %s94 = smul.u32 8, %s12
      %p95 = scmp.lt.s32.totalorder %s94, 15
      %s96 = scalar_select %p95, %s94, 15
      %s97 = smul.addr %s96, 8
      %s98 = scalar_lea.vmem %s0, %s97
      %p99 = pneg %p33
      %p100 = pneg %p30
      %p101 = pneg %p59
      %p102 = pneg %p56
      %s103 = smul.u32 8, %s12
      %p104 = scmp.lt.s32.totalorder %s103, 15
      %s105 = scalar_select %p104, %s103, 15
      %s106 = smul.addr %s105, 8
      %s107 = scalar_lea.vmem %s1, %s106
      %s108 = smul.u32 8, %s12
      %p109 = scmp.lt.s32.totalorder %s108, 15
      %s110 = scalar_select %p109, %s108, 15
      %s111 = smul.addr %s110, 8
      %s112 = scalar_lea.vmem %s0, %s111
      %s113 = smul.u32 8, %s12
      %s114 = smul.u32 8, %s12
      %p115 = scmp.lt.s32.totalorder %s114, 15
      %s116 = scalar_select %p115, %s114, 15
      %s117 = smul.addr %s116, 8
      %s118 = scalar_lea.vmem %s1, %s117
      %s119 = smul.u32 8, %s12
      %v120 = vld [vmem:[%s112] sm:$0xff]
      %v121 = vld [vmem:[%s112 + $0x8] sm:$0xff]
      %v122 = vld [vmem:[%s112 + $0x10] sm:$0xff]
      %v123 = vld [vmem:[%s112 + $0x18] sm:$0xff]
      %v124 = vld [vmem:[%s112 + $0x20] sm:$0xff]
      %v125 = vld [vmem:[%s112 + $0x28] sm:$0xff]
      %v126 = vld [vmem:[%s112 + $0x30] sm:$0xff]
      %v127 = vld [vmem:[%s112 + $0x38] sm:$0xff]
      %vm128 = vcmp.eq.f32.partialorder %v120, 1.0
      %vm129 = vcmp.eq.f32.partialorder %v121, 1.0
      %vm130 = vcmp.eq.f32.partialorder %v122, 1.0
      %vm131 = vcmp.eq.f32.partialorder %v123, 1.0
      %vm132 = vcmp.eq.f32.partialorder %v124, 1.0
      %vm133 = vcmp.eq.f32.partialorder %v125, 1.0
      %vm134 = vcmp.eq.f32.partialorder %v126, 1.0
      %vm135 = vcmp.eq.f32.partialorder %v127, 1.0
      %v136 = vlaneseq
      %v137 = vand.u32 %v136, 127
      %vm138 = vcmp.eq.s32.totalorder %v137, 4
      %v139 = vsel %vm128, 1, 0
      %v140 = vsel %vm129, 1, 0
      %v141 = vsel %vm130, 1, 0
      %v142 = vsel %vm131, 1, 0
      %v143 = vsel %vm132, 1, 0
      %v144 = vsel %vm133, 1, 0
      %v145 = vsel %vm134, 1, 0
      %v146 = vsel %vm135, 1, 0
      %147 = vset.pattern.permute.xlu0 13
      %148 = vperm.xlu0 %147, %v139
      %v149 = vpop.permute.xlu0 %148
      %150 = vset.pattern.permute.xlu0 13
      %151 = vperm.xlu0 %150, %v140
      %v152 = vpop.permute.xlu0 %151
      %153 = vset.pattern.permute.xlu0 13
      %154 = vperm.xlu0 %153, %v141
      %v155 = vpop.permute.xlu0 %154
      %156 = vset.pattern.permute.xlu0 13
      %157 = vperm.xlu0 %156, %v142
      %v158 = vpop.permute.xlu0 %157
      %159 = vset.pattern.permute.xlu0 13
      %160 = vperm.xlu0 %159, %v143
      %v161 = vpop.permute.xlu0 %160
      %162 = vset.pattern.permute.xlu0 13
      %163 = vperm.xlu0 %162, %v144
      %v164 = vpop.permute.xlu0 %163
      %165 = vset.pattern.permute.xlu0 13
      %166 = vperm.xlu0 %165, %v145
      %v167 = vpop.permute.xlu0 %166
      %168 = vset.pattern.permute.xlu0 13
      %169 = vperm.xlu0 %168, %v146
      %v170 = vpop.permute.xlu0 %169
      %vm171 = vcmp.eq.s32.totalorder %v149, 1
      %vm172 = vcmp.eq.s32.totalorder %v152, 1
      %vm173 = vcmp.eq.s32.totalorder %v155, 1
      %vm174 = vcmp.eq.s32.totalorder %v158, 1
      %vm175 = vcmp.eq.s32.totalorder %v161, 1
      %vm176 = vcmp.eq.s32.totalorder %v164, 1
      %vm177 = vcmp.eq.s32.totalorder %v167, 1
      %vm178 = vcmp.eq.s32.totalorder %v170, 1
      %vm179 = vmand %vm138, %vm171
      %vm180 = vmand %vm138, %vm172
      %vm181 = vmand %vm138, %vm173
      %vm182 = vmand %vm138, %vm174
      %vm183 = vmand %vm138, %vm175
      %vm184 = vmand %vm138, %vm176
      %vm185 = vmand %vm138, %vm177
      %vm186 = vmand %vm138, %vm178
      %vm187 = vcmp.eq.s32.totalorder %v137, 3
      %188 = vset.pattern.permute.xlu0 9
      %189 = vperm.xlu0 %188, %v139
      %v190 = vpop.permute.xlu0 %189
      %191 = vset.pattern.permute.xlu0 9
      %192 = vperm.xlu0 %191, %v140
      %v193 = vpop.permute.xlu0 %192
      %194 = vset.pattern.permute.xlu0 9
      %195 = vperm.xlu0 %194, %v141
      %v196 = vpop.permute.xlu0 %195
      %197 = vset.pattern.permute.xlu0 9
      %198 = vperm.xlu0 %197, %v142
      %v199 = vpop.permute.xlu0 %198
      %200 = vset.pattern.permute.xlu0 9
      %201 = vperm.xlu0 %200, %v143
      %v202 = vpop.permute.xlu0 %201
      %203 = vset.pattern.permute.xlu0 9
      %204 = vperm.xlu0 %203, %v144
      %v205 = vpop.permute.xlu0 %204
      %206 = vset.pattern.permute.xlu0 9
      %207 = vperm.xlu0 %206, %v145
      %v208 = vpop.permute.xlu0 %207
      %209 = vset.pattern.permute.xlu0 9
      %210 = vperm.xlu0 %209, %v146
      %v211 = vpop.permute.xlu0 %210
      %vm212 = vcmp.eq.s32.totalorder %v190, 1
      %vm213 = vcmp.eq.s32.totalorder %v193, 1
      %vm214 = vcmp.eq.s32.totalorder %v196, 1
      %vm215 = vcmp.eq.s32.totalorder %v199, 1
      %vm216 = vcmp.eq.s32.totalorder %v202, 1
      %vm217 = vcmp.eq.s32.totalorder %v205, 1
      %vm218 = vcmp.eq.s32.totalorder %v208, 1
      %vm219 = vcmp.eq.s32.totalorder %v211, 1
      %vm220 = vmand %vm187, %vm212
      %vm221 = vmand %vm187, %vm213
      %vm222 = vmand %vm187, %vm214
      %vm223 = vmand %vm187, %vm215
      %vm224 = vmand %vm187, %vm216
      %vm225 = vmand %vm187, %vm217
      %vm226 = vmand %vm187, %vm218
      %vm227 = vmand %vm187, %vm219
      %vm228 = vmor %vm179, %vm220
      %vm229 = vmor %vm180, %vm221
      %vm230 = vmor %vm181, %vm222
      %vm231 = vmor %vm182, %vm223
      %vm232 = vmor %vm183, %vm224
      %vm233 = vmor %vm184, %vm225
      %vm234 = vmor %vm185, %vm226
      %vm235 = vmor %vm186, %vm227
      %vm236 = vcmp.eq.s32.totalorder %v137, 1
      %237 = vset.pattern.permute.xlu0 8
      %238 = vperm.xlu0 %237, %v139
      %v239 = vpop.permute.xlu0 %238
      %240 = vset.pattern.permute.xlu0 8
      %241 = vperm.xlu0 %240, %v140
      %v242 = vpop.permute.xlu0 %241
      %243 = vset.pattern.permute.xlu0 8
      %244 = vperm.xlu0 %243, %v141
      %v245 = vpop.permute.xlu0 %244
      %246 = vset.pattern.permute.xlu0 8
      %247 = vperm.xlu0 %246, %v142
      %v248 = vpop.permute.xlu0 %247
      %249 = vset.pattern.permute.xlu0 8
      %250 = vperm.xlu0 %249, %v143
      %v251 = vpop.permute.xlu0 %250
      %252 = vset.pattern.permute.xlu0 8
      %253 = vperm.xlu0 %252, %v144
      %v254 = vpop.permute.xlu0 %253
      %255 = vset.pattern.permute.xlu0 8
      %256 = vperm.xlu0 %255, %v145
      %v257 = vpop.permute.xlu0 %256
      %258 = vset.pattern.permute.xlu0 8
      %259 = vperm.xlu0 %258, %v146
      %v260 = vpop.permute.xlu0 %259
      %vm261 = vcmp.eq.s32.totalorder %v239, 1
      %vm262 = vcmp.eq.s32.totalorder %v242, 1
      %vm263 = vcmp.eq.s32.totalorder %v245, 1
      %vm264 = vcmp.eq.s32.totalorder %v248, 1
      %vm265 = vcmp.eq.s32.totalorder %v251, 1
      %vm266 = vcmp.eq.s32.totalorder %v254, 1
      %vm267 = vcmp.eq.s32.totalorder %v257, 1
      %vm268 = vcmp.eq.s32.totalorder %v260, 1
      %vm269 = vmand %vm236, %vm261
      %vm270 = vmand %vm236, %vm262
      %vm271 = vmand %vm236, %vm263
      %vm272 = vmand %vm236, %vm264
      %vm273 = vmand %vm236, %vm265
      %vm274 = vmand %vm236, %vm266
      %vm275 = vmand %vm236, %vm267
      %vm276 = vmand %vm236, %vm268
      %vm277 = vmor %vm228, %vm269
      %vm278 = vmor %vm229, %vm270
      %vm279 = vmor %vm230, %vm271
      %vm280 = vmor %vm231, %vm272
      %vm281 = vmor %vm232, %vm273
      %vm282 = vmor %vm233, %vm274
      %vm283 = vmor %vm234, %vm275
      %vm284 = vmor %vm235, %vm276
      %vm285 = vcmp.eq.s32.totalorder %v137, 2
      %286 = vset.pattern.permute.xlu0 4
      %287 = vperm.xlu0 %286, %v139
      %v288 = vpop.permute.xlu0 %287
      %289 = vset.pattern.permute.xlu0 4
      %290 = vperm.xlu0 %289, %v140
      %v291 = vpop.permute.xlu0 %290
      %292 = vset.pattern.permute.xlu0 4
      %293 = vperm.xlu0 %292, %v141
      %v294 = vpop.permute.xlu0 %293
      %295 = vset.pattern.permute.xlu0 4
      %296 = vperm.xlu0 %295, %v142
      %v297 = vpop.permute.xlu0 %296
      %298 = vset.pattern.permute.xlu0 4
      %299 = vperm.xlu0 %298, %v143
      %v300 = vpop.permute.xlu0 %299
      %301 = vset.pattern.permute.xlu0 4
      %302 = vperm.xlu0 %301, %v144
      %v303 = vpop.permute.xlu0 %302
      %304 = vset.pattern.permute.xlu0 4
      %305 = vperm.xlu0 %304, %v145
      %v306 = vpop.permute.xlu0 %305
      %307 = vset.pattern.permute.xlu0 4
      %308 = vperm.xlu0 %307, %v146
      %v309 = vpop.permute.xlu0 %308
      %vm310 = vcmp.eq.s32.totalorder %v288, 1
      %vm311 = vcmp.eq.s32.totalorder %v291, 1
      %vm312 = vcmp.eq.s32.totalorder %v294, 1
      %vm313 = vcmp.eq.s32.totalorder %v297, 1
      %vm314 = vcmp.eq.s32.totalorder %v300, 1
      %vm315 = vcmp.eq.s32.totalorder %v303, 1
      %vm316 = vcmp.eq.s32.totalorder %v306, 1
      %vm317 = vcmp.eq.s32.totalorder %v309, 1
      %vm318 = vmand %vm285, %vm310
      %vm319 = vmand %vm285, %vm311
      %vm320 = vmand %vm285, %vm312
      %vm321 = vmand %vm285, %vm313
      %vm322 = vmand %vm285, %vm314
      %vm323 = vmand %vm285, %vm315
      %vm324 = vmand %vm285, %vm316
      %vm325 = vmand %vm285, %vm317
      %vm326 = vmor %vm277, %vm318
      %vm327 = vmor %vm278, %vm319
      %vm328 = vmor %vm279, %vm320
      %vm329 = vmor %vm280, %vm321
      %vm330 = vmor %vm281, %vm322
      %vm331 = vmor %vm282, %vm323
      %vm332 = vmor %vm283, %vm324
      %vm333 = vmor %vm284, %vm325
      %v334 = vsel %vm326, -1e+09, 1.0
      %v335 = vsel %vm327, -1e+09, 1.0
      %v336 = vsel %vm328, -1e+09, 1.0
      %v337 = vsel %vm329, -1e+09, 1.0
      %v338 = vsel %vm330, -1e+09, 1.0
      %v339 = vsel %vm331, -1e+09, 1.0
      %v340 = vsel %vm332, -1e+09, 1.0
      %v341 = vsel %vm333, -1e+09, 1.0
      %vm342 = vcmask 64512
      %343 = vst.msk [vmem:[%s118] sm:$0xff] %vm342, %v334
      %344 = vst.msk [vmem:[%s118 + $0x8] sm:$0xff] %vm342, %v335
      %345 = vst.msk [vmem:[%s118 + $0x10] sm:$0xff] %vm342, %v336
      %346 = vst.msk [vmem:[%s118 + $0x18] sm:$0xff] %vm342, %v337
      %347 = vst.msk [vmem:[%s118 + $0x20] sm:$0xff] %vm342, %v338
      %348 = vst.msk [vmem:[%s118 + $0x28] sm:$0xff] %vm342, %v339
      %349 = vst.msk [vmem:[%s118 + $0x30] sm:$0xff] %vm342, %v340
      %350 = vst.msk [vmem:[%s118 + $0x38] sm:$0xff] %vm342, %v341
      %s351 = smul.u32 8, %s12
      %p352 = scmp.lt.s32.totalorder %s351, 15
      %s353 = scalar_select %p352, %s351, 15
      %s354 = smul.addr %s353, 8
      %s355 = scalar_lea.vmem %s1, %s354
      // Predicated region
      $region25: #{_forward_2d.1} parent=23 // pred_check
        %p356 = pneg %p56
      $region26: #{_forward_2d.1} parent=23 // pred_check_branch
        %358 = sbr.rel (%p356) target = $region28
      $region27: #{_forward_2d.1} parent=23 // pred_region
        %s359 = smul.u32 8, %s12
      $region28: #{_forward_2d.1} parent=23 // pred_fallthru
        _
    $region24: #{_forward_2d.1} parent=5 // pred_fallthru
      _
    %p360 = scmp.le.s32.totalorder 2, %s7
    // Predicated region
    $region29: #{_forward_2d.1} parent=5 // pred_check
      %p361 = pneg %p360
    $region30: #{_forward_2d.1} parent=5 // pred_check_branch
      %363 = sbr.rel (%p361) target = $region32
    $region31: #{_forward_2d.1} parent=5 // pred_region
      %s364 = ssub.s32 %s7, 2
      // Predicated region
      $region33: #{_forward_2d.1} parent=31 // pred_check
        %p365 = pneg %p62
      $region34: #{_forward_2d.1} parent=31 // pred_check_branch
        %367 = sbr.rel (%p365) target = $region36
      $region35: #{_forward_2d.1} parent=31 // pred_region
        %s368 = smul.u32 8, %s13
        %p369 = scmp.lt.s32.totalorder %s368, 15
        %s370 = scalar_select %p369, %s368, 15
        %s371 = smul.addr %s370, 8
        %s372 = scalar_lea.vmem %s1, %s371
      $region36: #{_forward_2d.1} parent=31 // pred_fallthru
        _
    $region32: #{_forward_2d.1} parent=5 // pred_fallthru
      _
  $region6: #{_forward_2d.1} parent=0 // loop_footer
    %s11 = sadd.s32 1, %s7
  $region7: #{_forward_2d.1} parent=0 // loop_footer_branch
    %6 = sbr.rel target = $region3
  $region8: #{_forward_2d.1} parent=0 // loop_exit
    _

</llo_original>
